<compile_context>
chip_gen: v5e
topology: v5e:2x2
jax: 0.10.0
libtpu: 0.0.40
codegen_flags: <defaults>
</compile_context>

<pallas_src>
import functools
import math

import jax
import jax.numpy as jnp
from jax.experimental import pallas as pl
from jax.experimental.pallas import tpu as pltpu

_LANE = 128            # lane width (last dim)
_SUBLANE = 8           # sublane width (second-to-last dim)
_MAX_TILE_ROWS = 1024  # batch-tile cap (still tiny vs. VMEM on all gens)
_SPLIT_BATCH = 256     # above this, use >=2 grid steps (v7x 2-TC sharding)


def _round_up(x, m):
    return ((x + m - 1) // m) * m


def _actor_fused_kernel(*refs, n_layers):
    """Fused MLP forward: x -> relu(xW0+b0) -> ... -> tanh(xW_{L-1}+b_{L-1}).

    refs = (x_ref, w0_ref, b0_ref, ..., w{L-1}_ref, b{L-1}_ref, out_ref).
    All operands are small and fully resident in VMEM; hidden activations
    stay in vregs.
    """
    x_ref = refs[0]
    out_ref = refs[-1]
    x = x_ref[...]
    for i in range(n_layers):
        w = refs[1 + 2 * i][...]            # (in_dim, out_pad)
        b = refs[2 + 2 * i][...]            # (1, out_pad) -> broadcast over rows
        y = jnp.dot(x, w, preferred_element_type=jnp.float32) + b
        if i < n_layers - 1:
            x = jnp.maximum(y, 0.0)
        else:
            x = jnp.tanh(y)
    out_ref[...] = x.astype(out_ref.dtype)


def init_actor_params(key, state_size, action_size, fc_units):
    """Deterministic init mirroring Actor.reset_parameters.

    PyTorch's hidden_init uses weight.size()[0] (= out_features) as "fan_in";
    we replicate that quirk. Biases are filled with 0.1.
    Weights are stored transposed: (in_features, out_features).
    """
    layers = [state_size] + list(fc_units) + [action_size]
    params = []
    n_layers = len(layers) - 1
    for i in range(n_layers):
        in_f, out_f = layers[i], layers[i + 1]
        key, wkey = jax.random.split(key)
        if i < n_layers - 1:
            lim = 1.0 / math.sqrt(out_f)    # hidden_init quirk: size()[0]
        else:
            lim = 0.003
        w_t = jax.random.uniform(
            wkey, (in_f, out_f), minval=-lim, maxval=lim, dtype=jnp.float32
        )
        b = jnp.full((1, out_f), 0.1, dtype=jnp.float32)
        params.append((w_t, b))
    return params


def pad_actor_params(params):
    """One-time lane padding of weights/biases (hoisted out of the forward).

    Layer-0 input dim is left at the real state_size (matches the unpadded x
    block); every layer's output dim is zero-padded to a multiple of 128, and
    the next layer's input dim is padded to match.  Padding is exact: padded
    weight rows/cols and biases are 0, so padded hidden lanes stay 0 through
    ReLU and contribute nothing downstream.
    """
    padded = []
    in_dim = params[0][0].shape[0]          # state_size (unpadded K for layer 0)
    for (w, b) in params:
        out_dim = w.shape[1]
        out_pad = _round_up(out_dim, _LANE)
        w_p = jnp.zeros((in_dim, out_pad), jnp.float32)
        w_p = w_p.at[: w.shape[0], :out_dim].set(w)
        b_p = jnp.zeros((1, out_pad), jnp.float32)
        b_p = b_p.at[:, :out_dim].set(b)
        padded.append((w_p, b_p))
        in_dim = out_pad
    return padded


@functools.partial(jax.jit, static_argnames=("action_size",))
def actor_forward(state, padded_params, *, action_size):
    """state: (batch, state_size) f32 -> actions (batch, action_size) f32."""
    batch, state_size = state.shape
    n_layers = len(padded_params)
    act_pad = padded_params[-1][0].shape[1]

    # Batch tiling: one grid step for small batches (amortize per-step cost),
    # >=2 sublane-aligned tiles for larger batches so v7x's two TensorCores
    # both get work via dimension_semantics=("parallel",).
    if batch <= _SPLIT_BATCH:
        tb = _round_up(batch, _SUBLANE)
    else:
        tb = min(_MAX_TILE_ROWS, _round_up(pl.cdiv(batch, 2), _SUBLANE))
    grid = (pl.cdiv(batch, tb),)            # ragged last block clipped by Pallas

    # Block specs: x streamed per grid step (unpadded last dim = full array
    # dim), weights/biases full-block with constant index_map (stay resident),
    # lane-dense (128-wide) output for unmasked vector stores.
    in_specs = [pl.BlockSpec((tb, state_size), lambda i: (i, 0))]
    flat_args = [state]
    for (w_p, b_p) in padded_params:
        in_specs.append(pl.BlockSpec(w_p.shape, lambda i: (0, 0)))
        in_specs.append(pl.BlockSpec(b_p.shape, lambda i: (0, 0)))
        flat_args += [w_p, b_p]
    out_spec = pl.BlockSpec((tb, act_pad), lambda i: (i, 0))

    # Advisory cost hint so XLA schedules the custom call sensibly.
    flops = 2 * batch * sum(
        int(w.shape[0]) * int(w.shape[1]) for (w, _) in padded_params
    )
    transcendentals = batch * act_pad       # final tanh
    bytes_accessed = 4 * (
        batch * state_size
        + sum(int(w.size) + int(b.size) for (w, b) in padded_params)
        + batch * act_pad
    )

    kernel = functools.partial(_actor_fused_kernel, n_layers=n_layers)
    out_p = pl.pallas_call(
        kernel,
        out_shape=jax.ShapeDtypeStruct((batch, act_pad), jnp.float32),
        grid=grid,
        in_specs=in_specs,
        out_specs=out_spec,
        compiler_params=pltpu.CompilerParams(
            dimension_semantics=("parallel",)
        ),
        cost_estimate=pl.CostEstimate(
            flops=flops,
            transcendentals=transcendentals,
            bytes_accessed=bytes_accessed,
        ),
    )(*flat_args)

    # Tiny wrapper slice to the logical action width (kept: callers expect the
    # module's true output shape).
    return out_p[:, :action_size]


def _reference_forward(state, params):
    x = state
    for i, (w_t, b) in enumerate(params):
        y = x @ w_t + b
        x = jnp.maximum(y, 0.0) if i < len(params) - 1 else jnp.tanh(y)
    return x


if __name__ == "__main__":
    # Small shapes consistent with the module.
    batch = 8
    state_size = 16
    action_size = 4
    fc_units = [32, 32]

    key = jax.random.PRNGKey(0)
    key, skey = jax.random.split(key)
    state = jax.random.normal(skey, (batch, state_size), dtype=jnp.float32)

    params = init_actor_params(key, state_size, action_size, fc_units)
    padded_params = pad_actor_params(params)   # one-time, outside the hot path

    out = actor_forward(state, padded_params, action_size=action_size)
    out = jax.block_until_ready(out)

    ref = _reference_forward(state, params)
    assert out.shape == (batch, action_size)
    assert jnp.allclose(out, ref, atol=1e-5, rtol=1e-5)

    # Larger batch: exercises the ragged cdiv grid and the >=2-tile split
    # (TensorCore sharding on v7x).
    key, bkey = jax.random.split(key)
    big_state = jax.random.normal(bkey, (300, state_size), dtype=jnp.float32)
    big_out = jax.block_until_ready(
        actor_forward(big_state, padded_params, action_size=action_size)
    )
    big_ref = _reference_forward(big_state, params)
    assert big_out.shape == (300, action_size)
    assert jnp.allclose(big_out, big_ref, atol=1e-5, rtol=1e-5)

    print("KERNEL_OK")
</pallas_src>

<mosaic_0001>
module attributes {stable_mosaic.version = 11 : i64} {
  func.func @_actor_fused_kernel(%arg0: i32, %arg1: memref<8x16xf32, #tpu.memory_space<vmem>>, %arg2: memref<16x128xf32, #tpu.memory_space<vmem>>, %arg3: memref<1x128xf32, #tpu.memory_space<vmem>>, %arg4: memref<128x128xf32, #tpu.memory_space<vmem>>, %arg5: memref<1x128xf32, #tpu.memory_space<vmem>>, %arg6: memref<128x128xf32, #tpu.memory_space<vmem>>, %arg7: memref<1x128xf32, #tpu.memory_space<vmem>>, %arg8: memref<8x128xf32, #tpu.memory_space<vmem>>) attributes {dimension_semantics = [#tpu.dimension_semantics<parallel>], iteration_bounds = array<i64: 1>, scalar_prefetch = 0 : i64, scratch_operands = 0 : i64, tpu.core_type = #tpu.core_type<tc>, window_params = [{transform_indices = @transform_0, window_bounds = array<i64: 8, 16>}, {pipeline_mode = #tpu.pipeline_mode<synchronous>, transform_indices = @transform_1, window_bounds = array<i64: 16, 128>}, {pipeline_mode = #tpu.pipeline_mode<synchronous>, transform_indices = @transform_2, window_bounds = array<i64: 1, 128>}, {pipeline_mode = #tpu.pipeline_mode<synchronous>, transform_indices = @transform_3, window_bounds = array<i64: 128, 128>}, {pipeline_mode = #tpu.pipeline_mode<synchronous>, transform_indices = @transform_4, window_bounds = array<i64: 1, 128>}, {pipeline_mode = #tpu.pipeline_mode<synchronous>, transform_indices = @transform_5, window_bounds = array<i64: 128, 128>}, {pipeline_mode = #tpu.pipeline_mode<synchronous>, transform_indices = @transform_6, window_bounds = array<i64: 1, 128>}, {transform_indices = @transform_7, window_bounds = array<i64: 8, 128>}]} {
    %c0 = arith.constant 0 : index
    %c0_0 = arith.constant 0 : index
    %0 = vector.load %arg1[%c0, %c0_0] : memref<8x16xf32, #tpu.memory_space<vmem>>, vector<8x16xf32>
    %c0_1 = arith.constant 0 : index
    %c0_2 = arith.constant 0 : index
    %1 = vector.load %arg2[%c0_1, %c0_2] : memref<16x128xf32, #tpu.memory_space<vmem>>, vector<16x128xf32>
    %c0_3 = arith.constant 0 : index
    %c0_4 = arith.constant 0 : index
    %2 = vector.load %arg3[%c0_3, %c0_4] : memref<1x128xf32, #tpu.memory_space<vmem>>, vector<1x128xf32>
    %cst = arith.constant dense<0.000000e+00> : vector<8x128xf32>
    %3 = tpu.matmul %0, %1, %cst {dimension_numbers = #tpu.dot_dimension_numbers<[1], [0], [0], [1], [0, 0, 1, 1], [], []>} : vector<8x16xf32>, vector<16x128xf32>, vector<8x128xf32> -> vector<8x128xf32>
    %4 = vector.broadcast %2 : vector<1x128xf32> to vector<8x128xf32>
    %5 = arith.addf %3, %4 : vector<8x128xf32>
    %cst_5 = arith.constant 0.000000e+00 : f32
    %6 = vector.broadcast %cst_5 : f32 to vector<8x128xf32>
    %7 = arith.maximumf %5, %6 : vector<8x128xf32>
    %c0_6 = arith.constant 0 : index
    %c0_7 = arith.constant 0 : index
    %8 = vector.load %arg4[%c0_6, %c0_7] : memref<128x128xf32, #tpu.memory_space<vmem>>, vector<128x128xf32>
    %c0_8 = arith.constant 0 : index
    %c0_9 = arith.constant 0 : index
    %9 = vector.load %arg5[%c0_8, %c0_9] : memref<1x128xf32, #tpu.memory_space<vmem>>, vector<1x128xf32>
    %cst_10 = arith.constant dense<0.000000e+00> : vector<8x128xf32>
    %10 = tpu.matmul %7, %8, %cst_10 {dimension_numbers = #tpu.dot_dimension_numbers<[1], [0], [0], [1], [0, 0, 1, 1], [], []>} : vector<8x128xf32>, vector<128x128xf32>, vector<8x128xf32> -> vector<8x128xf32>
    %11 = vector.broadcast %9 : vector<1x128xf32> to vector<8x128xf32>
    %12 = arith.addf %10, %11 : vector<8x128xf32>
    %cst_11 = arith.constant 0.000000e+00 : f32
    %13 = vector.broadcast %cst_11 : f32 to vector<8x128xf32>
    %14 = arith.maximumf %12, %13 : vector<8x128xf32>
    %c0_12 = arith.constant 0 : index
    %c0_13 = arith.constant 0 : index
    %15 = vector.load %arg6[%c0_12, %c0_13] : memref<128x128xf32, #tpu.memory_space<vmem>>, vector<128x128xf32>
    %c0_14 = arith.constant 0 : index
    %c0_15 = arith.constant 0 : index
    %16 = vector.load %arg7[%c0_14, %c0_15] : memref<1x128xf32, #tpu.memory_space<vmem>>, vector<1x128xf32>
    %cst_16 = arith.constant dense<0.000000e+00> : vector<8x128xf32>
    %17 = tpu.matmul %14, %15, %cst_16 {dimension_numbers = #tpu.dot_dimension_numbers<[1], [0], [0], [1], [0, 0, 1, 1], [], []>} : vector<8x128xf32>, vector<128x128xf32>, vector<8x128xf32> -> vector<8x128xf32>
    %18 = vector.broadcast %16 : vector<1x128xf32> to vector<8x128xf32>
    %19 = arith.addf %17, %18 : vector<8x128xf32>
    %20 = math.tanh %19 : vector<8x128xf32>
    %c0_17 = arith.constant 0 : index
    %c0_18 = arith.constant 0 : index
    %21 = vector.load %arg8[%c0_17, %c0_18] : memref<8x128xf32, #tpu.memory_space<vmem>>, vector<8x128xf32>
    tpu.vector_store %arg8[%c0_17, %c0_18], %20 {strides = array<i32>} : memref<8x128xf32, #tpu.memory_space<vmem>>, vector<8x128xf32>,
    return
  }
  func.func @transform_0(%arg0: i32) -> (i32, i32) {
    %c0_i32 = arith.constant 0 : i32
    %c0_i32_0 = arith.constant 0 : i32
    return %arg0, %c0_i32 : i32, i32
  }
  func.func @transform_1(%arg0: i32) -> (i32, i32) {
    %c0_i32 = arith.constant 0 : i32
    %c0_i32_0 = arith.constant 0 : i32
    %c0_i32_1 = arith.constant 0 : i32
    return %c0_i32, %c0_i32_0 : i32, i32
  }
  func.func @transform_2(%arg0: i32) -> (i32, i32) {
    %c0_i32 = arith.constant 0 : i32
    %c0_i32_0 = arith.constant 0 : i32
    %c0_i32_1 = arith.constant 0 : i32
    return %c0_i32, %c0_i32_0 : i32, i32
  }
  func.func @transform_3(%arg0: i32) -> (i32, i32) {
    %c0_i32 = arith.constant 0 : i32
    %c0_i32_0 = arith.constant 0 : i32
    %c0_i32_1 = arith.constant 0 : i32
    return %c0_i32, %c0_i32_0 : i32, i32
  }
  func.func @transform_4(%arg0: i32) -> (i32, i32) {
    %c0_i32 = arith.constant 0 : i32
    %c0_i32_0 = arith.constant 0 : i32
    %c0_i32_1 = arith.constant 0 : i32
    return %c0_i32, %c0_i32_0 : i32, i32
  }
  func.func @transform_5(%arg0: i32) -> (i32, i32) {
    %c0_i32 = arith.constant 0 : i32
    %c0_i32_0 = arith.constant 0 : i32
    %c0_i32_1 = arith.constant 0 : i32
    return %c0_i32, %c0_i32_0 : i32, i32
  }
  func.func @transform_6(%arg0: i32) -> (i32, i32) {
    %c0_i32 = arith.constant 0 : i32
    %c0_i32_0 = arith.constant 0 : i32
    %c0_i32_1 = arith.constant 0 : i32
    return %c0_i32, %c0_i32_0 : i32, i32
  }
  func.func @transform_7(%arg0: i32) -> (i32, i32) {
    %c0_i32 = arith.constant 0 : i32
    %c0_i32_0 = arith.constant 0 : i32
    return %arg0, %c0_i32 : i32, i32
  }
}

</mosaic_0001>

<llo_original>
// kernel: actor_forward.1
$region0: #{actor_forward.1}
  #allocation0 [shape = 'u32[]', space=smem, size = 0x4, offset = 0x4, fixed_abs, tag = 'smem constant byte address 0x4 - core index']
  #allocation1 [shape = 'u32[72,128]{1,0:T(1,128)}', space=vmem, size = 0x9000, scoped, tag = 'internal scratch']
  %s0 = inlined_call_operand.hbm [shape: f32[8,16], index: 0, kind: input, shape index: {}]
  %s1 = inlined_call_operand.hbm [shape: f32[16,128], index: 1, kind: input, shape index: {}]
  %s2 = inlined_call_operand.vmem [shape: f32[1,128], index: 2, kind: input, shape index: {}]
  %s3 = inlined_call_operand.hbm [shape: f32[128,128], index: 3, kind: input, shape index: {}]
  %s4 = inlined_call_operand.vmem [shape: f32[1,128], index: 4, kind: input, shape index: {}]
  %s5 = inlined_call_operand.hbm [shape: f32[128,128], index: 5, kind: input, shape index: {}]
  %s6 = inlined_call_operand.vmem [shape: f32[1,128], index: 6, kind: input, shape index: {}]
  %s7 = inlined_call_operand.vmem [shape: f32[8,128], index: 7, kind: output, shape index: {}]
  %s8 = sld [smem:[#allocation0]]
  $region54: #{actor_forward.1} parent=0
    _
  %s10 = ssub.s32 1, %s8
  %s11 = scalar_select 0, %s10, %s8
  $region1: #{actor_forward.1} parent=0
    #allocation2 [shape = 'u8[4096]{0}', space=vmem, size = 0x1000, scoped, tag = 'input window, operand 0, single buffered']
    #allocation3 [shape = 's32[1]{0}', space=sflag, size = 0x4, scoped, tag = 'scoped memory for actor_forward.1']
    #allocation4 [shape = 'u8[8192]{0}', space=vmem, size = 0x2000, scoped, tag = 'input window, operand 1, single buffered']
    #allocation5 [shape = 's32[1]{0}', space=sflag, size = 0x4, scoped, tag = 'scoped memory for actor_forward.1']
    #allocation6 [shape = 'u8[65536]{0}', space=vmem, size = 0x10000, scoped, tag = 'input window, operand 3, single buffered']
    #allocation7 [shape = 'u8[65536]{0}', space=vmem, size = 0x10000, scoped, tag = 'input window, operand 5, single buffered']
    #allocation8 [shape = 's32[1]{0}', space=sflag, size = 0x4, scoped, tag = 'scoped memory for actor_forward.1']
    %12 = vsyncpa [#allocation3], 0
    %13 = vsyncpa [#allocation5], 0
    %14 = vsyncpa [#allocation8], 0
    // Predicated region
    $region2: #{actor_forward.1} parent=1 // pred_check
      _
    $region3: #{actor_forward.1} parent=1 // pred_check_branch
      %16 = sbr.rel (0) target = $region5
    $region4: #{actor_forward.1} parent=1 // pred_region
      %18 = vsyncadd [#allocation3], 0
      %s20 = sshll.u32 %s0, 4
      %s21 = int_to_ptr.hbm [resolvable:$true] %s20
      %s22 = sshll.u32 [#allocation2], 4
      %s23 = int_to_ptr.vmem [resolvable:$true] %s22
      %25 = dma.hbm_to_vmem [thread:$0]  %s21, 128, %s23, [#allocation3]
    $region5: #{actor_forward.1} parent=1 // pred_fallthru
      _
    // Predicated region
    $region6: #{actor_forward.1} parent=1 // pred_check
      _
    $region7: #{actor_forward.1} parent=1 // pred_check_branch
      %27 = sbr.rel (0) target = $region9
    $region8: #{actor_forward.1} parent=1 // pred_region
      %29 = vsyncadd [#allocation5], 0
      %s30 = sshll.u32 %s1, 4
      %s31 = int_to_ptr.hbm [resolvable:$true] %s30
      %s32 = sshll.u32 [#allocation4], 4
      %s33 = int_to_ptr.vmem [resolvable:$true] %s32
      %38 = dma.hbm_to_vmem [thread:$0]  %s31, 256, %s33, [#allocation5], 128, 128, 8
    $region9: #{actor_forward.1} parent=1 // pred_fallthru
      _
    // Predicated region
    $region10: #{actor_forward.1} parent=1 // pred_check
      _
    $region11: #{actor_forward.1} parent=1 // pred_check_branch
      %40 = sbr.rel (0) target = $region13
    $region12: #{actor_forward.1} parent=1 // pred_region
      _
    $region13: #{actor_forward.1} parent=1 // pred_fallthru
      _
    // Predicated region
    $region14: #{actor_forward.1} parent=1 // pred_check
      _
    $region15: #{actor_forward.1} parent=1 // pred_check_branch
      %42 = sbr.rel (0) target = $region17
    $region16: #{actor_forward.1} parent=1 // pred_region
      %44 = vsyncadd [#allocation5], 0
      %s45 = sshll.u32 %s3, 4
      %s46 = int_to_ptr.hbm [resolvable:$true] %s45
      %s47 = sshll.u32 [#allocation6], 4
      %s48 = int_to_ptr.vmem [resolvable:$true] %s47
      %53 = dma.hbm_to_vmem [thread:$0]  %s46, 2048, %s48, [#allocation5], 128, 128, 8
    $region17: #{actor_forward.1} parent=1 // pred_fallthru
      _
    // Predicated region
    $region18: #{actor_forward.1} parent=1 // pred_check
      _
    $region19: #{actor_forward.1} parent=1 // pred_check_branch
      %55 = sbr.rel (0) target = $region21
    $region20: #{actor_forward.1} parent=1 // pred_region
      _
    $region21: #{actor_forward.1} parent=1 // pred_fallthru
      _
    // Predicated region
    $region22: #{actor_forward.1} parent=1 // pred_check
      _
    $region23: #{actor_forward.1} parent=1 // pred_check_branch
      %57 = sbr.rel (0) target = $region25
    $region24: #{actor_forward.1} parent=1 // pred_region
      %59 = vsyncadd [#allocation8], 0
      %s60 = sshll.u32 %s5, 4
      %s61 = int_to_ptr.hbm [resolvable:$true] %s60
      %s62 = sshll.u32 [#allocation7], 4
      %s63 = int_to_ptr.vmem [resolvable:$true] %s62
      %68 = dma.hbm_to_vmem [thread:$0]  %s61, 2048, %s63, [#allocation8], 128, 128, 8
    $region25: #{actor_forward.1} parent=1 // pred_fallthru
      _
    // Predicated region
    $region26: #{actor_forward.1} parent=1 // pred_check
      _
    $region27: #{actor_forward.1} parent=1 // pred_check_branch
      %70 = sbr.rel (0) target = $region29
    $region28: #{actor_forward.1} parent=1 // pred_region
      _
    $region29: #{actor_forward.1} parent=1 // pred_fallthru
      _
    // Predicated region
    $region30: #{actor_forward.1} parent=1 // pred_check
      _
    $region31: #{actor_forward.1} parent=1 // pred_check_branch
      %72 = sbr.rel (0) target = $region33
    $region32: #{actor_forward.1} parent=1 // pred_region
      %74 = dma.done [#allocation3], 128
    $region33: #{actor_forward.1} parent=1 // pred_fallthru
      _
    // Predicated region
    $region34: #{actor_forward.1} parent=1 // pred_check
      _
    $region35: #{actor_forward.1} parent=1 // pred_check_branch
      %76 = sbr.rel (0) target = $region37
    $region36: #{actor_forward.1} parent=1 // pred_region
      %78 = dma.done [#allocation5], 256
    $region37: #{actor_forward.1} parent=1 // pred_fallthru
      _
    // Predicated region
    $region38: #{actor_forward.1} parent=1 // pred_check
      _
    $region39: #{actor_forward.1} parent=1 // pred_check_branch
      %80 = sbr.rel (0) target = $region41
    $region40: #{actor_forward.1} parent=1 // pred_region
      %82 = dma.done [#allocation5], 2048
    $region41: #{actor_forward.1} parent=1 // pred_fallthru
      _
    // Predicated region
    $region42: #{actor_forward.1} parent=1 // pred_check
      _
    $region43: #{actor_forward.1} parent=1 // pred_check_branch
      %84 = sbr.rel (0) target = $region45
    $region44: #{actor_forward.1} parent=1 // pred_region
      %86 = dma.done [#allocation8], 2048
    $region45: #{actor_forward.1} parent=1 // pred_fallthru
      _
    %v87 = vld [vmem:[#allocation2] sm:$0xff]
    %v88 = vld [vmem:[#allocation4] sm:$0xff]
    %v89 = vld [vmem:[#allocation4 + $0x8] sm:$0xff]
    %v90 = vld [vmem:[%s2] sm:$0x1]
    %v92 = vperm.slane %v90, 0
    %vm94 = vcmask 130048
    %v96 = vsel %vm94, %v87, 0
    %98 = vmatpush.msra.mxu0 0.0
    %99 = vmatpush.msra.mxu0 0.0
    %100 = vmatpush.msra.mxu0 0.0
    %101 = vmatpush.msra.mxu0 0.0
    %102 = vmatpush.msra.mxu0 0.0
    %103 = vmatpush.msra.mxu0 0.0
    %104 = vmatpush.msra.mxu0 0.0
    %105 = vmatpush.msra.mxu0 0.0
    %106 = vmatpush.msra.mxu0 0.0
    %107 = vmatpush.msra.mxu0 0.0
    %108 = vmatpush.msra.mxu0 0.0
    %109 = vmatpush.msra.mxu0 0.0
    %110 = vmatpush.msra.mxu0 0.0
    %111 = vmatpush.msra.mxu0 0.0
    %112 = vmatpush.msra.mxu0 %v89
    %113 = vmatpush.msra.mxu0 %v88
    %114 = vmatmul.f32.gmra.mxu0 %v96
    %v115 = vpop.f32.mrf.mxu0
    %v116 = vadd.f32 %v92, %v115
    %117 = vdwg.mxu0
    %v118 = vmax.f32 %v116, 0.0
    %v119 = vld [vmem:[#allocation6] sm:$0xff]
    %v120 = vld [vmem:[#allocation6 + $0x8] sm:$0xff]
    %v121 = vld [vmem:[#allocation6 + $0x10] sm:$0xff]
    %v122 = vld [vmem:[#allocation6 + $0x18] sm:$0xff]
    %v123 = vld [vmem:[#allocation6 + $0x20] sm:$0xff]
    %v124 = vld [vmem:[#allocation6 + $0x28] sm:$0xff]
    %v125 = vld [vmem:[#allocation6 + $0x30] sm:$0xff]
    %v126 = vld [vmem:[#allocation6 + $0x38] sm:$0xff]
    %v127 = vld [vmem:[#allocation6 + $0x40] sm:$0xff]
    %v128 = vld [vmem:[#allocation6 + $0x48] sm:$0xff]
    %v129 = vld [vmem:[#allocation6 + $0x50] sm:$0xff]
    %v130 = vld [vmem:[#allocation6 + $0x58] sm:$0xff]
    %v131 = vld [vmem:[#allocation6 + $0x60] sm:$0xff]
    %v132 = vld [vmem:[#allocation6 + $0x68] sm:$0xff]
    %v133 = vld [vmem:[#allocation6 + $0x70] sm:$0xff]
    %v134 = vld [vmem:[#allocation6 + $0x78] sm:$0xff]
    %v135 = vld [vmem:[%s4] sm:$0x1]
    %v137 = vperm.slane %v135, 0
    %139 = vmatpush.msra.mxu0 %v134
    %140 = vmatpush.msra.mxu0 %v133
    %141 = vmatpush.msra.mxu0 %v132
    %142 = vmatpush.msra.mxu0 %v131
    %143 = vmatpush.msra.mxu0 %v130
    %144 = vmatpush.msra.mxu0 %v129
    %145 = vmatpush.msra.mxu0 %v128
    %146 = vmatpush.msra.mxu0 %v127
    %147 = vmatpush.msra.mxu0 %v126
    %148 = vmatpush.msra.mxu0 %v125
    %149 = vmatpush.msra.mxu0 %v124
    %150 = vmatpush.msra.mxu0 %v123
    %151 = vmatpush.msra.mxu0 %v122
    %152 = vmatpush.msra.mxu0 %v121
    %153 = vmatpush.msra.mxu0 %v120
    %154 = vmatpush.msra.mxu0 %v119
    %155 = vmatmul.f32.gmra.mxu0 %v118
    %v156 = vpop.f32.mrf.mxu0
    %v157 = vadd.f32 %v137, %v156
    %158 = vdwg.mxu0
    %v159 = vmax.f32 %v157, 0.0
    %v160 = vld [vmem:[#allocation7] sm:$0xff]
    %v161 = vld [vmem:[#allocation7 + $0x8] sm:$0xff]
    %v162 = vld [vmem:[#allocation7 + $0x10] sm:$0xff]
    %v163 = vld [vmem:[#allocation7 + $0x18] sm:$0xff]
    %v164 = vld [vmem:[#allocation7 + $0x20] sm:$0xff]
    %v165 = vld [vmem:[#allocation7 + $0x28] sm:$0xff]
    %v166 = vld [vmem:[#allocation7 + $0x30] sm:$0xff]
    %v167 = vld [vmem:[#allocation7 + $0x38] sm:$0xff]
    %v168 = vld [vmem:[#allocation7 + $0x40] sm:$0xff]
    %v169 = vld [vmem:[#allocation7 + $0x48] sm:$0xff]
    %v170 = vld [vmem:[#allocation7 + $0x50] sm:$0xff]
    %v171 = vld [vmem:[#allocation7 + $0x58] sm:$0xff]
    %v172 = vld [vmem:[#allocation7 + $0x60] sm:$0xff]
    %v173 = vld [vmem:[#allocation7 + $0x68] sm:$0xff]
    %v174 = vld [vmem:[#allocation7 + $0x70] sm:$0xff]
    %v175 = vld [vmem:[#allocation7 + $0x78] sm:$0xff]
    %v176 = vld [vmem:[%s6] sm:$0x1]
    %v178 = vperm.slane %v176, 0
    %180 = vmatpush.msra.mxu0 %v175
    %181 = vmatpush.msra.mxu0 %v174
    %182 = vmatpush.msra.mxu0 %v173
    %183 = vmatpush.msra.mxu0 %v172
    %184 = vmatpush.msra.mxu0 %v171
    %185 = vmatpush.msra.mxu0 %v170
    %186 = vmatpush.msra.mxu0 %v169
    %187 = vmatpush.msra.mxu0 %v168
    %188 = vmatpush.msra.mxu0 %v167
    %189 = vmatpush.msra.mxu0 %v166
    %190 = vmatpush.msra.mxu0 %v165
    %191 = vmatpush.msra.mxu0 %v164
    %192 = vmatpush.msra.mxu0 %v163
    %193 = vmatpush.msra.mxu0 %v162
    %194 = vmatpush.msra.mxu0 %v161
    %195 = vmatpush.msra.mxu0 %v160
    %196 = vmatmul.f32.gmra.mxu0 %v159
    %v197 = vpop.f32.mrf.mxu0
    %v198 = vadd.f32 %v178, %v197
    %199 = vdwg.mxu0
    %v200 = vtanh.pop %v198
    %201 = vst [vmem:[%s7] sm:$0xff] %v200
    // Predicated region
    $region46: #{actor_forward.1} parent=1 // pred_check
      _
    $region47: #{actor_forward.1} parent=1 // pred_check_branch
      %203 = sbr.rel (0) target = $region49
    $region48: #{actor_forward.1} parent=1 // pred_region
      _
    $region49: #{actor_forward.1} parent=1 // pred_fallthru
      _
    // Predicated region
    $region50: #{actor_forward.1} parent=1 // pred_check
      _
    $region51: #{actor_forward.1} parent=1 // pred_check_branch
      %205 = sbr.rel (0) target = $region53
    $region52: #{actor_forward.1} parent=1 // pred_region
      _
    $region53: #{actor_forward.1} parent=1 // pred_fallthru
      _
    %206 = vsyncpa [#allocation3], 1
    %207 = vsyncpa [#allocation5], 1
    %208 = vsyncpa [#allocation8], 1

</llo_original>
